<compile_context>
chip_gen: v7x
topology: tpu7x:2x2x1
jax: 0.10.0
libtpu: 0.0.40
codegen_flags: <defaults>
</compile_context>

<pallas_src>
import jax
import jax.numpy as jnp
from jax import lax
from jax.experimental import pallas as pl
from jax.experimental.pallas import tpu as pltpu


def _round_up(x, m):
    return ((x + m - 1) // m) * m


def _embed_kernel(ids_ref, nvalid_ref, table_hbm, out_ref, sem):
    """Gather this step's TBLK embedding rows from HBM into the output block."""
    blk = pl.program_id(0)
    tblk = out_ref.shape[0]
    base = blk * tblk
    n_valid = nvalid_ref[0]

    def row_copy(t):
        tok = ids_ref[base + t]                       # scalar read from SMEM
        return pltpu.make_async_copy(
            table_hbm.at[pl.ds(tok, 1), :],           # (1, D) row in HBM
            out_ref.at[pl.ds(t, 1), :],               # (1, D) row of out block
            sem)

    def issue(t, carry):
        @pl.when(base + t < n_valid)                  # skip padded tail tokens
        def _():
            row_copy(t).start()
        return carry

    def drain(t, carry):
        @pl.when(base + t < n_valid)
        def _():
            row_copy(t).wait()
        return carry

    lax.fori_loop(0, tblk, issue, 0)                  # launch all row DMAs
    lax.fori_loop(0, tblk, drain, 0)                  # wait for completion


def embedder_forward(ids, table, *, tblk=256):
    """Equivalent of Embedder.forward: ids (B, S) int -> (B, S, d_model)."""
    orig_shape = ids.shape
    vocab, d_model = table.shape
    flat = ids.reshape(-1).astype(jnp.int32)
    n = flat.shape[0]

    # Token-block size: large (256) to amortize per-grid-step overhead, but
    # never larger than the (sublane-aligned) number of tokens.
    tblk = max(8, min(tblk, _round_up(n, 8)))
    n_pad = _round_up(n, tblk)
    flat = jnp.pad(flat, (0, n_pad - n))
    nb = n_pad // tblk
    n_valid = jnp.array([n], dtype=jnp.int32)

    out = pl.pallas_call(
        _embed_kernel,
        out_shape=jax.ShapeDtypeStruct((n_pad, d_model), table.dtype),
        grid_spec=pltpu.PrefetchScalarGridSpec(
            num_scalar_prefetch=2,                    # ids + n_valid -> SMEM
            grid=(nb,),
            in_specs=[pl.BlockSpec(memory_space=pl.ANY)],   # table stays in HBM
            out_specs=pl.BlockSpec((tblk, d_model),
                                   lambda i, ids, n: (i, 0)),
            scratch_shapes=[pltpu.SemaphoreType.DMA(())],
        ),
        compiler_params=pltpu.CompilerParams(
            dimension_semantics=("parallel",)),       # token blocks shard TCs
    )(flat, n_valid, table)

    return out[:n].reshape(*orig_shape, d_model)


if __name__ == "__main__":
    vocab_size = 128
    d_model = 128
    batch, seq = 2, 8

    key = jax.random.PRNGKey(0)
    k_ids, k_w = jax.random.split(key)

    # nn.Embedding(vocab_size, d_model) weight ~ N(0, 1), float32.
    table = jax.random.normal(k_w, (vocab_size, d_model), dtype=jnp.float32)
    ids = jax.random.randint(k_ids, (batch, seq), 0, vocab_size, dtype=jnp.int32)

    out = embedder_forward(ids, table)
    out = jax.block_until_ready(out)

    # Reference check (plain JAX gather).
    ref = jnp.take(table, ids, axis=0)
    assert out.shape == (batch, seq, d_model)
    assert out.dtype == jnp.float32
    assert jnp.allclose(out, ref, atol=1e-6, rtol=1e-6)

    print("KERNEL_OK")
</pallas_src>

<mosaic_0001>
module attributes {stable_mosaic.version = 11 : i64} {
  func.func @_embed_kernel(%arg0: i32, %arg1: memref<16xi32, #tpu.memory_space<smem>>, %arg2: memref<1xi32, #tpu.memory_space<smem>>, %arg3: memref<128x128xf32, #tpu.memory_space<any>>, %arg4: memref<16x128xf32, #tpu.memory_space<vmem>>, %arg5: memref<!tpu.dma_semaphore, #tpu.memory_space<semaphore_mem>>) attributes {dimension_semantics = [#tpu.dimension_semantics<parallel>], iteration_bounds = array<i64: 1>, scalar_prefetch = 2 : i64, scratch_operands = 1 : i64, tpu.core_type = #tpu.core_type<tc>, window_params = [{}, {transform_indices = @transform_1, window_bounds = array<i64: 16, 128>}]} {
    %c16_i32 = arith.constant 16 : i32
    %0 = arith.muli %arg0, %c16_i32 : i32
    %c0 = arith.constant 0 : index
    %1 = memref.load %arg2[%c0] : memref<1xi32, #tpu.memory_space<smem>>
    %c0_i32 = arith.constant 0 : i32
    %c16_i32_0 = arith.constant 16 : i32
    %2 = arith.addi %c0_i32, %c16_i32_0 : i32
    %c1_i32 = arith.constant 1 : i32
    scf.for %arg6 = %c0_i32 to %2 step %c1_i32  : i32 {
      %4 = arith.addi %0, %arg6 : i32
      %5 = arith.cmpi slt, %4, %1 : i32
      %6 = arith.extui %5 : i1 to i32
      %c0_i32_6 = arith.constant 0 : i32
      %7 = arith.cmpi ne, %6, %c0_i32_6 : i32
      scf.if %7 {
        %8 = arith.addi %0, %arg6 : i32
        %9 = arith.index_cast %8 : i32 to index
        %10 = memref.load %arg1[%9] : memref<16xi32, #tpu.memory_space<smem>>
        %c0_i32_7 = arith.constant 0 : i32
        %11 = tpu.memref_slice %arg3[%10, %c0_i32_7] : memref<128x128xf32, #tpu.memory_space<any>> -> memref<1x128xf32, #tpu.memory_space<any>>
        %c0_i32_8 = arith.constant 0 : i32
        %12 = tpu.memref_slice %arg4[%arg6, %c0_i32_8] : memref<16x128xf32, #tpu.memory_space<vmem>> -> memref<1x128xf32, #tpu.memory_space<vmem>>
        tpu.enqueue_dma source(%11 : memref<1x128xf32, #tpu.memory_space<any>>) target(%12 : memref<1x128xf32, #tpu.memory_space<vmem>>) target_semaphore(%arg5 : memref<!tpu.dma_semaphore, #tpu.memory_space<semaphore_mem>>)
      } else {
      }
    }
    %c16_i32_1 = arith.constant 16 : i32
    %c0_i32_2 = arith.constant 0 : i32
    %c16_i32_3 = arith.constant 16 : i32
    %3 = arith.addi %c0_i32_2, %c16_i32_3 : i32
    %c1_i32_4 = arith.constant 1 : i32
    scf.for %arg6 = %c0_i32_2 to %3 step %c1_i32_4  : i32 {
      %4 = arith.addi %0, %arg6 : i32
      %5 = arith.cmpi slt, %4, %1 : i32
      %6 = arith.extui %5 : i1 to i32
      %c0_i32_6 = arith.constant 0 : i32
      %7 = arith.cmpi ne, %6, %c0_i32_6 : i32
      scf.if %7 {
        %8 = arith.addi %0, %arg6 : i32
        %9 = arith.index_cast %8 : i32 to index
        %10 = memref.load %arg1[%9] : memref<16xi32, #tpu.memory_space<smem>>
        %c0_i32_7 = arith.constant 0 : i32
        %11 = tpu.memref_slice %arg3[%10, %c0_i32_7] : memref<128x128xf32, #tpu.memory_space<any>> -> memref<1x128xf32, #tpu.memory_space<any>>
        %c0_i32_8 = arith.constant 0 : i32
        %12 = tpu.memref_slice %arg4[%arg6, %c0_i32_8] : memref<16x128xf32, #tpu.memory_space<vmem>> -> memref<1x128xf32, #tpu.memory_space<vmem>>
        tpu.wait_dma2 semaphore(%arg5 : memref<!tpu.dma_semaphore, #tpu.memory_space<semaphore_mem>>) src(%11 : memref<1x128xf32, #tpu.memory_space<any>>) dst(%12 : memref<1x128xf32, #tpu.memory_space<vmem>>)
      } else {
      }
    }
    %c16_i32_5 = arith.constant 16 : i32
    return
  }
  func.func @transform_1(%arg0: i32, %arg1: memref<16xi32, #tpu.memory_space<smem>>, %arg2: memref<1xi32, #tpu.memory_space<smem>>) -> (i32, i32) {
    %c0_i32 = arith.constant 0 : i32
    %c0_i32_0 = arith.constant 0 : i32
    return %arg0, %c0_i32 : i32, i32
  }
}

</mosaic_0001>

<llo_original>
// kernel: tpu_custom_call.1
$region0: #{tpu_custom_call.1}
  #allocation0 [shape = 'u32[]', space=smem, size = 0x4, offset = 0x4, fixed_abs, tag = 'smem constant byte address 0x4 - core index']
  #allocation1 [shape = 'u32[144,128]{1,0:T(1,128)}', space=vmem, size = 0x12000, scoped, tag = 'internal scratch']
  #allocation2 [shape = 's32[1]{0}', space=sflag, size = 0x4, scoped, tag = 'scratch operand']
  #allocation3 [shape = 's32[1]{0}', space=sflag, size = 0x4, scoped, tag = 'scoped memory for tpu_custom_call.1']
  #allocation4 [shape = 'u8[512]{0}', space=smem, size = 0x200, scoped, tag = 'prefetched SMEM operand 0']
  #allocation5 [shape = 's32[1]{0:T(128)S(6)}', space=smem, size = 0x200, scoped, tag = 'prefetched SMEM operand 1']
  #allocation8 [shape = 's32[]', space=sflag, size = 0x4, offset = 0, fixed_abs, tag = 'sflag constant byte address 0x0 - dummy sync flag']
  #allocation9 [shape = 's32[]', space=sflag, size = 0x4, offset = 0, fixed_abs, tag = 'sflag constant byte address 0x0 - dummy sync flag']
  #allocation10 [shape = 'u32[]', space=smem, size = 0x4, offset = 0x44, fixed_abs, tag = 'smem constant byte address 0x44 - assertion arg 0']
  #allocation11 [shape = 'u32[]', space=smem, size = 0x4, offset = 0x48, fixed_abs, tag = 'smem constant byte address 0x48 - assertion arg 1']
  %s0 = inlined_call_operand.vmem [shape: s32[16], index: 0, kind: input, shape index: {}]
  %s1 = inlined_call_operand.<no memory space> [shape: s32[1], index: 1, kind: input, shape index: {}]
  %s2 = inlined_call_operand.hbm [shape: f32[128,128], index: 2, kind: input, shape index: {}]
  %s3 = inlined_call_operand.hbm [shape: f32[16,128], index: 3, kind: output, shape index: {}]
  %s4 = sld [smem:[#allocation0]]
  $region36: #{tpu_custom_call.1} parent=0
    _
  %s6 = ssub.s32 1, %s4
  %s7 = scalar_select 0, %s6, %s4
  %s8 = sshll.u32 %s0, 4
  %s9 = int_to_ptr.vmem [resolvable:$true] %s8
  %11 = dma.vmem_to_smem %s9, 16, [#allocation4], [#allocation3]
  %12 = sst [smem:[#allocation5]] %s1
  %13 = dma.done [#allocation3], 16
  %14 = sfence
  $region1: #{tpu_custom_call.1} parent=0
    #allocation6 [shape = 'u8[8192]{0}', space=vmem, size = 0x2000, scoped, tag = 'output window, operand 0, single buffered']
    #allocation7 [shape = 's32[1]{0}', space=sflag, size = 0x4, scoped, tag = 'scoped memory for tpu_custom_call.1']
    %15 = vsyncpa [#allocation7], 0
    %s16 = smul.u32 0, 16
    %s17 = sld [smem:[#allocation5]]
    loop: start=0, step=1, limit=16
    $region2: #{tpu_custom_call.1} parent=1 // loop_pre_header
      _
    $region3: #{tpu_custom_call.1} parent=1 // loop_header
      %s19 = sphi 0, %s23
      %p20 = scmp.ge.s32.totalorder %s19, 16
    $region4: #{tpu_custom_call.1} parent=1 // loop_header_branch
      %22 = sbr.rel (%p20) target = $region8
    $region5: #{tpu_custom_call.1} parent=1 // loop_body
      %s24 = sadd.s32 %s16, %s19
      %p25 = scmp.lt.s32.totalorder %s24, %s17
      // Predicated region
      $region9: #{tpu_custom_call.1} parent=5 // pred_check
        %p26 = pneg %p25
      $region10: #{tpu_custom_call.1} parent=5 // pred_check_branch
        %28 = sbr.rel (%p26) target = $region12
      $region11: #{tpu_custom_call.1} parent=5 // pred_region
        %s29 = sld [smem:[#allocation4 + %s24]]
        %s30 = smul.addr %s29, 16
        %s31 = scalar_lea.hbm %s2, %s30
        %s32 = scalar_lea.vmem [#allocation6], %s19
        // Predicated region
        $region13: #{tpu_custom_call.1} parent=11 // pred_check
          _
        $region14: #{tpu_custom_call.1} parent=11 // pred_check_branch
          %34 = sbr.rel target = $region16
        $region15: #{tpu_custom_call.1} parent=11 // pred_region
          %35 = sst [smem:[#allocation10]] [#allocation9]
          %36 = sst [smem:[#allocation11]] [#allocation8]
        $region16: #{tpu_custom_call.1} parent=11 // pred_fallthru
          _
        %38 = shalt.err (0)
        %s40 = sshll.u32 %s32, 4
        %s41 = int_to_ptr.vmem [resolvable:$true] %s40
        %43 = dma.hbm_to_vmem [thread:$0]  %s31, 16, %s41, [#allocation2]
      $region12: #{tpu_custom_call.1} parent=5 // pred_fallthru
        _
    $region6: #{tpu_custom_call.1} parent=1 // loop_footer
      %s23 = sadd.s32 1, %s19
    $region7: #{tpu_custom_call.1} parent=1 // loop_footer_branch
      %18 = sbr.rel target = $region3
    $region8: #{tpu_custom_call.1} parent=1 // loop_exit
      _
    loop: start=0, step=1, limit=16
    $region17: #{tpu_custom_call.1} parent=1 // loop_pre_header
      _
    $region18: #{tpu_custom_call.1} parent=1 // loop_header
      %s45 = sphi 0, %s49
      %p46 = scmp.ge.s32.totalorder %s45, 16
    $region19: #{tpu_custom_call.1} parent=1 // loop_header_branch
      %48 = sbr.rel (%p46) target = $region23
    $region20: #{tpu_custom_call.1} parent=1 // loop_body
      %s50 = sadd.s32 %s16, %s45
      %p51 = scmp.lt.s32.totalorder %s50, %s17
      // Predicated region
      $region24: #{tpu_custom_call.1} parent=20 // pred_check
        %p52 = pneg %p51
      $region25: #{tpu_custom_call.1} parent=20 // pred_check_branch
        %54 = sbr.rel (%p52) target = $region27
      $region26: #{tpu_custom_call.1} parent=20 // pred_region
        %s55 = sld [smem:[#allocation4 + %s50]]
        %s56 = smul.u32 1, 1
        %s57 = sshll.u32 %s56, 4
        %58 = dma.done [#allocation2], %s57
      $region27: #{tpu_custom_call.1} parent=20 // pred_fallthru
        _
    $region21: #{tpu_custom_call.1} parent=1 // loop_footer
      %s49 = sadd.s32 1, %s45
    $region22: #{tpu_custom_call.1} parent=1 // loop_footer_branch
      %44 = sbr.rel target = $region18
    $region23: #{tpu_custom_call.1} parent=1 // loop_exit
      _
    // Predicated region
    $region28: #{tpu_custom_call.1} parent=1 // pred_check
      _
    $region29: #{tpu_custom_call.1} parent=1 // pred_check_branch
      %60 = sbr.rel (0) target = $region31
    $region30: #{tpu_custom_call.1} parent=1 // pred_region
      %s62 = ssub.s32 256, 256
      %63 = vsyncadd [#allocation7], %s62
      %s64 = sshll.u32 [#allocation6], 4
      %s65 = int_to_ptr.vmem [resolvable:$true] %s64
      %70 = dma.vmem_to_hbm [thread:$0]  %s65, 256, %s3, [#allocation7], 128, 128, 8
    $region31: #{tpu_custom_call.1} parent=1 // pred_fallthru
      _
    // Predicated region
    $region32: #{tpu_custom_call.1} parent=1 // pred_check
      _
    $region33: #{tpu_custom_call.1} parent=1 // pred_check_branch
      %72 = sbr.rel (0) target = $region35
    $region34: #{tpu_custom_call.1} parent=1 // pred_region
      %73 = dma.done [#allocation7], 256
    $region35: #{tpu_custom_call.1} parent=1 // pred_fallthru
      _
    %74 = vsyncpa [#allocation7], 1
  %75 = vsyncmov [#allocation2]
  %s76 = vpop.sfrf %75
  %p77 = scmp.eq.s32.totalorder %s76, 0
  %p78 = pneg %p77
  %80 = shalt.err (%p78)

</llo_original>
